<compile_context>
chip_gen: v7x
topology: tpu7x:2x2x1
jax: 0.10.0
libtpu: 0.0.40
codegen_flags: <defaults>
</compile_context>

<pallas_src>
import functools

import jax
import jax.numpy as jnp
from jax.experimental import pallas as pl
from jax.experimental.pallas import tpu as pltpu


LANE = 128          # vreg lane width
BATCH_ALIGN = 16    # bf16 sublane packing: keep batch tiles 16-row aligned
TB_CAP = 1024       # max rows per grid step (per-step overhead amortization)


def _round_up(n, m):
    return ((n + m - 1) // m) * m


def _qnet_kernel(x_ref, w1_ref, b1_ref, w2_ref, b2_ref, o_ref):
    # Layer 1: bf16 MXU matmul with f32 accumulation; bias + ReLU in f32.
    h = jnp.dot(x_ref[...], w1_ref[...], preferred_element_type=jnp.float32)
    h = jnp.maximum(h + b1_ref[...], 0.0)
    # Layer 2: kept fully in f32 (w2 stored f32) so the hidden activation is
    # not re-quantized; negligible cost since the kernel is HBM-bound.
    out = jnp.dot(h, w2_ref[...], preferred_element_type=jnp.float32)
    # bf16 store: halves writeback of the lane-dense (TB, 128) output slab;
    # precision is already bounded by the bf16 layer-1 inputs.
    o_ref[...] = (out + b2_ref[...]).astype(o_ref.dtype)


def prepare_params(w1, b1, w2, b2):
    """One-time padding/cast of the parameters (hoisted out of the forward).

    Weights are stored pre-transposed, i.e. (in, out), so the kernel computes
    x @ w + b == PyTorch's x @ W.T + b.  Zero padding keeps the math exact
    (padded hidden lanes see bias 0 -> relu(0)=0 -> contribute 0).
    """
    IN, HID = w1.shape
    OUT = w2.shape[1]
    HID_P = _round_up(HID, LANE)
    OUT_P = _round_up(OUT, LANE)

    w1_p = jnp.zeros((IN, HID_P), jnp.bfloat16).at[:, :HID].set(
        w1.astype(jnp.bfloat16))
    b1_p = jnp.zeros((1, HID_P), jnp.float32).at[:, :HID].set(
        b1.astype(jnp.float32))
    w2_p = jnp.zeros((HID_P, OUT_P), jnp.float32).at[:HID, :OUT].set(
        w2.astype(jnp.float32))
    b2_p = jnp.zeros((1, OUT_P), jnp.float32).at[:, :OUT].set(
        b2.astype(jnp.float32))
    return w1_p, b1_p, w2_p, b2_p


@functools.partial(jax.jit, static_argnames=("out_size",))
def linear_qnet_forward(x, w1_p, b1_p, w2_p, b2_p, *, out_size):
    """Two-layer MLP forward.  x: (B, IN) f32 -> (B, out_size) f32.

    Params must come from prepare_params() (padded / pre-cast, done once).
    """
    B, IN = x.shape
    HID_P = w1_p.shape[1]
    OUT_P = w2_p.shape[1]

    # --- adaptive batch tiling ------------------------------------------
    B_AL = _round_up(B, BATCH_ALIGN)
    n = pl.cdiv(B_AL, TB_CAP)
    if n == 1 and B_AL >= 512:
        n = 2                      # let v7x megacore split large single-tile batches
    if n > 1 and n % 2 == 1:
        n += 1                     # even step count -> balanced 2-TC split on v7x
    TB = _round_up(pl.cdiv(B_AL, n), BATCH_ALIGN)
    B_P = n * TB

    # x: single fused cast+pad along the batch axis only (feature dim stays
    # narrow at IN=11 -> no 128-wide x HBM round trip).
    if B_P == B:
        x_p = x.astype(jnp.bfloat16)
    else:
        x_p = jnp.zeros((B_P, IN), jnp.bfloat16).at[:B].set(
            x.astype(jnp.bfloat16))

    out_p = pl.pallas_call(
        _qnet_kernel,
        out_shape=jax.ShapeDtypeStruct((B_P, OUT_P), jnp.bfloat16),
        grid=(n,),
        in_specs=[
            pl.BlockSpec((TB, IN), lambda i: (i, 0)),        # x: walks batch, narrow
            pl.BlockSpec((IN, HID_P), lambda i: (0, 0)),     # w1: VMEM-resident bf16
            pl.BlockSpec((1, HID_P), lambda i: (0, 0)),      # b1: resident f32
            pl.BlockSpec((HID_P, OUT_P), lambda i: (0, 0)),  # w2: resident f32
            pl.BlockSpec((1, OUT_P), lambda i: (0, 0)),      # b2: resident f32
        ],
        out_specs=pl.BlockSpec((TB, OUT_P), lambda i: (i, 0)),
        compiler_params=pltpu.CompilerParams(
            dimension_semantics=("parallel",)),               # 2 TCs on v7x
    )(x_p, w1_p, b1_p, w2_p, b2_p)

    # NOTE: padded batch rows hold garbage (relu(b1) @ w2 + b2); slice them off
    # here, immediately after the call — never consume out_p directly.
    return out_p[:B, :out_size].astype(jnp.float32)


def init_params(key, input_size, hidden_size, output_size):
    """nn.Linear-style init (uniform +/- 1/sqrt(fan_in)), weights stored (in, out)."""
    k1, k2, k3, k4 = jax.random.split(key, 4)
    lim1 = 1.0 / (input_size ** 0.5)
    lim2 = 1.0 / (hidden_size ** 0.5)
    w1 = jax.random.uniform(k1, (input_size, hidden_size), jnp.float32, -lim1, lim1)
    b1 = jax.random.uniform(k2, (1, hidden_size), jnp.float32, -lim1, lim1)
    w2 = jax.random.uniform(k3, (hidden_size, output_size), jnp.float32, -lim2, lim2)
    b2 = jax.random.uniform(k4, (1, output_size), jnp.float32, -lim2, lim2)
    return w1, b1, w2, b2


# TODO(synk): Linear_QNet.save() (torch.save checkpoint I/O) is host-side and has
# no Pallas equivalent; only forward() is implemented.


if __name__ == "__main__":
    # Small shapes consistent with a snake Q-network: 11 inputs, 3 actions.
    B, IN, HID, OUT = 2, 11, 32, 3

    key = jax.random.PRNGKey(0)
    kx, kp = jax.random.split(key)
    x = jax.random.normal(kx, (B, IN), dtype=jnp.float32)
    w1, b1, w2, b2 = init_params(kp, IN, HID, OUT)

    # One-time parameter preparation (padding + casts hoisted out of forward).
    w1_p, b1_p, w2_p, b2_p = prepare_params(w1, b1, w2, b2)

    y = linear_qnet_forward(x, w1_p, b1_p, w2_p, b2_p, out_size=OUT)
    y = jax.block_until_ready(y)
    assert y.shape == (B, OUT)
    assert y.dtype == jnp.float32

    # Reference 1: pure f32 (exact PyTorch forward semantics); loose tolerance
    # covers the deliberate bf16 layer-1 inputs and bf16 output store.
    y_ref_f32 = jnp.maximum(x @ w1 + b1, 0.0) @ w2 + b2
    assert jnp.allclose(y, y_ref_f32, atol=3e-2, rtol=3e-2)

    # Reference 2: matching-precision model (bf16 layer-1 inputs, f32 layer 2,
    # bf16 output quantization).
    xb = x.astype(jnp.bfloat16).astype(jnp.float32)
    w1b = w1.astype(jnp.bfloat16).astype(jnp.float32)
    h = jnp.maximum(xb @ w1b + b1, 0.0)
    y_ref_q = (h @ w2 + b2).astype(jnp.bfloat16).astype(jnp.float32)
    assert jnp.allclose(y, y_ref_q, atol=1e-2, rtol=1e-2)

    # Multi-step grid sanity check (adaptive TB, even step count, edge padding).
    B2 = 600
    x2 = jax.random.normal(jax.random.PRNGKey(1), (B2, IN), dtype=jnp.float32)
    y2 = jax.block_until_ready(
        linear_qnet_forward(x2, w1_p, b1_p, w2_p, b2_p, out_size=OUT))
    y2_ref = jnp.maximum(x2 @ w1 + b1, 0.0) @ w2 + b2
    assert y2.shape == (B2, OUT)
    assert jnp.allclose(y2, y2_ref, atol=3e-2, rtol=3e-2)

    print("KERNEL_OK")
</pallas_src>

<mosaic_0001>
module attributes {stable_mosaic.version = 11 : i64} {
  func.func @_qnet_kernel(%arg0: i32, %arg1: memref<16x11xbf16, #tpu.memory_space<vmem>>, %arg2: memref<11x128xbf16, #tpu.memory_space<vmem>>, %arg3: memref<1x128xf32, #tpu.memory_space<vmem>>, %arg4: memref<128x128xf32, #tpu.memory_space<vmem>>, %arg5: memref<1x128xf32, #tpu.memory_space<vmem>>, %arg6: memref<16x128xbf16, #tpu.memory_space<vmem>>) attributes {dimension_semantics = [#tpu.dimension_semantics<parallel>], iteration_bounds = array<i64: 1>, scalar_prefetch = 0 : i64, scratch_operands = 0 : i64, tpu.core_type = #tpu.core_type<tc>, window_params = [{transform_indices = @transform_0, window_bounds = array<i64: 16, 11>}, {pipeline_mode = #tpu.pipeline_mode<synchronous>, transform_indices = @transform_1, window_bounds = array<i64: 11, 128>}, {pipeline_mode = #tpu.pipeline_mode<synchronous>, transform_indices = @transform_2, window_bounds = array<i64: 1, 128>}, {pipeline_mode = #tpu.pipeline_mode<synchronous>, transform_indices = @transform_3, window_bounds = array<i64: 128, 128>}, {pipeline_mode = #tpu.pipeline_mode<synchronous>, transform_indices = @transform_4, window_bounds = array<i64: 1, 128>}, {transform_indices = @transform_5, window_bounds = array<i64: 16, 128>}]} {
    %c0 = arith.constant 0 : index
    %c0_0 = arith.constant 0 : index
    %0 = vector.load %arg1[%c0, %c0_0] : memref<16x11xbf16, #tpu.memory_space<vmem>>, vector<16x11xbf16>
    %c0_1 = arith.constant 0 : index
    %c0_2 = arith.constant 0 : index
    %1 = vector.load %arg2[%c0_1, %c0_2] : memref<11x128xbf16, #tpu.memory_space<vmem>>, vector<11x128xbf16>
    %cst = arith.constant dense<0.000000e+00> : vector<16x128xf32>
    %2 = tpu.matmul %0, %1, %cst {dimension_numbers = #tpu.dot_dimension_numbers<[1], [0], [0], [1], [0, 0, 1, 1], [], []>} : vector<16x11xbf16>, vector<11x128xbf16>, vector<16x128xf32> -> vector<16x128xf32>
    %c0_3 = arith.constant 0 : index
    %c0_4 = arith.constant 0 : index
    %3 = vector.load %arg3[%c0_3, %c0_4] : memref<1x128xf32, #tpu.memory_space<vmem>>, vector<1x128xf32>
    %4 = vector.broadcast %3 : vector<1x128xf32> to vector<16x128xf32>
    %5 = arith.addf %2, %4 : vector<16x128xf32>
    %cst_5 = arith.constant 0.000000e+00 : f32
    %6 = vector.broadcast %cst_5 : f32 to vector<16x128xf32>
    %7 = arith.maximumf %5, %6 : vector<16x128xf32>
    %c0_6 = arith.constant 0 : index
    %c0_7 = arith.constant 0 : index
    %8 = vector.load %arg4[%c0_6, %c0_7] : memref<128x128xf32, #tpu.memory_space<vmem>>, vector<128x128xf32>
    %cst_8 = arith.constant dense<0.000000e+00> : vector<16x128xf32>
    %9 = tpu.matmul %7, %8, %cst_8 {dimension_numbers = #tpu.dot_dimension_numbers<[1], [0], [0], [1], [0, 0, 1, 1], [], []>} : vector<16x128xf32>, vector<128x128xf32>, vector<16x128xf32> -> vector<16x128xf32>
    %c0_9 = arith.constant 0 : index
    %c0_10 = arith.constant 0 : index
    %10 = vector.load %arg5[%c0_9, %c0_10] : memref<1x128xf32, #tpu.memory_space<vmem>>, vector<1x128xf32>
    %11 = vector.broadcast %10 : vector<1x128xf32> to vector<16x128xf32>
    %12 = arith.addf %9, %11 : vector<16x128xf32>
    %13 = arith.truncf %12 : vector<16x128xf32> to vector<16x128xbf16>
    %c0_11 = arith.constant 0 : index
    %c0_12 = arith.constant 0 : index
    %14 = vector.load %arg6[%c0_11, %c0_12] : memref<16x128xbf16, #tpu.memory_space<vmem>>, vector<16x128xbf16>
    tpu.vector_store %arg6[%c0_11, %c0_12], %13 {strides = array<i32>} : memref<16x128xbf16, #tpu.memory_space<vmem>>, vector<16x128xbf16>,
    return
  }
  func.func @transform_0(%arg0: i32) -> (i32, i32) {
    %c0_i32 = arith.constant 0 : i32
    %c0_i32_0 = arith.constant 0 : i32
    return %arg0, %c0_i32 : i32, i32
  }
  func.func @transform_1(%arg0: i32) -> (i32, i32) {
    %c0_i32 = arith.constant 0 : i32
    %c0_i32_0 = arith.constant 0 : i32
    %c0_i32_1 = arith.constant 0 : i32
    return %c0_i32, %c0_i32_0 : i32, i32
  }
  func.func @transform_2(%arg0: i32) -> (i32, i32) {
    %c0_i32 = arith.constant 0 : i32
    %c0_i32_0 = arith.constant 0 : i32
    %c0_i32_1 = arith.constant 0 : i32
    return %c0_i32, %c0_i32_0 : i32, i32
  }
  func.func @transform_3(%arg0: i32) -> (i32, i32) {
    %c0_i32 = arith.constant 0 : i32
    %c0_i32_0 = arith.constant 0 : i32
    %c0_i32_1 = arith.constant 0 : i32
    return %c0_i32, %c0_i32_0 : i32, i32
  }
  func.func @transform_4(%arg0: i32) -> (i32, i32) {
    %c0_i32 = arith.constant 0 : i32
    %c0_i32_0 = arith.constant 0 : i32
    %c0_i32_1 = arith.constant 0 : i32
    return %c0_i32, %c0_i32_0 : i32, i32
  }
  func.func @transform_5(%arg0: i32) -> (i32, i32) {
    %c0_i32 = arith.constant 0 : i32
    %c0_i32_0 = arith.constant 0 : i32
    return %arg0, %c0_i32 : i32, i32
  }
}

</mosaic_0001>

<llo_original>
// kernel: linear_qnet_forward.1
$region0: #{linear_qnet_forward.1}
  #allocation0 [shape = 'u32[]', space=smem, size = 0x4, offset = 0x4, fixed_abs, tag = 'smem constant byte address 0x4 - core index']
  #allocation1 [shape = 'u32[144,128]{1,0:T(1,128)}', space=vmem, size = 0x12000, scoped, tag = 'internal scratch']
  %s0 = inlined_call_operand.vmem [shape: bf16[16,11], index: 0, kind: input, shape index: {}]
  %s1 = inlined_call_operand.vmem [shape: bf16[11,128], index: 1, kind: input, shape index: {}]
  %s2 = inlined_call_operand.vmem [shape: f32[1,128], index: 2, kind: input, shape index: {}]
  %s3 = inlined_call_operand.hbm [shape: f32[128,128], index: 3, kind: input, shape index: {}]
  %s4 = inlined_call_operand.vmem [shape: f32[1,128], index: 4, kind: input, shape index: {}]
  %s5 = inlined_call_operand.vmem [shape: bf16[16,128], index: 5, kind: output, shape index: {}]
  %s6 = sld [smem:[#allocation0]]
  $region34: #{linear_qnet_forward.1} parent=0
    _
  %s8 = ssub.s32 1, %s6
  %s9 = scalar_select 0, %s8, %s6
  $region1: #{linear_qnet_forward.1} parent=0
    #allocation2 [shape = 'u8[65536]{0}', space=vmem, size = 0x10000, scoped, tag = 'input window, operand 3, single buffered']
    #allocation3 [shape = 's32[1]{0}', space=sflag, size = 0x4, scoped, tag = 'scoped memory for linear_qnet_forward.1']
    %10 = vsyncpa [#allocation3], 0
    // Predicated region
    $region2: #{linear_qnet_forward.1} parent=1 // pred_check
      _
    $region3: #{linear_qnet_forward.1} parent=1 // pred_check_branch
      %12 = sbr.rel (0) target = $region5
    $region4: #{linear_qnet_forward.1} parent=1 // pred_region
      _
    $region5: #{linear_qnet_forward.1} parent=1 // pred_fallthru
      _
    // Predicated region
    $region6: #{linear_qnet_forward.1} parent=1 // pred_check
      _
    $region7: #{linear_qnet_forward.1} parent=1 // pred_check_branch
      %14 = sbr.rel (0) target = $region9
    $region8: #{linear_qnet_forward.1} parent=1 // pred_region
      _
    $region9: #{linear_qnet_forward.1} parent=1 // pred_fallthru
      _
    // Predicated region
    $region10: #{linear_qnet_forward.1} parent=1 // pred_check
      _
    $region11: #{linear_qnet_forward.1} parent=1 // pred_check_branch
      %16 = sbr.rel (0) target = $region13
    $region12: #{linear_qnet_forward.1} parent=1 // pred_region
      _
    $region13: #{linear_qnet_forward.1} parent=1 // pred_fallthru
      _
    // Predicated region
    $region14: #{linear_qnet_forward.1} parent=1 // pred_check
      _
    $region15: #{linear_qnet_forward.1} parent=1 // pred_check_branch
      %18 = sbr.rel (0) target = $region17
    $region16: #{linear_qnet_forward.1} parent=1 // pred_region
      %s20 = ssub.s32 2048, 2048
      %21 = vsyncadd [#allocation3], %s20
      %s22 = sshll.u32 [#allocation2], 4
      %s23 = int_to_ptr.vmem [resolvable:$true] %s22
      %28 = dma.hbm_to_vmem [thread:$0]  %s3, 2048, %s23, [#allocation3], 128, 128, 8
    $region17: #{linear_qnet_forward.1} parent=1 // pred_fallthru
      _
    // Predicated region
    $region18: #{linear_qnet_forward.1} parent=1 // pred_check
      _
    $region19: #{linear_qnet_forward.1} parent=1 // pred_check_branch
      %30 = sbr.rel (0) target = $region21
    $region20: #{linear_qnet_forward.1} parent=1 // pred_region
      _
    $region21: #{linear_qnet_forward.1} parent=1 // pred_fallthru
      _
    // Predicated region
    $region22: #{linear_qnet_forward.1} parent=1 // pred_check
      _
    $region23: #{linear_qnet_forward.1} parent=1 // pred_check_branch
      %32 = sbr.rel (0) target = $region25
    $region24: #{linear_qnet_forward.1} parent=1 // pred_region
      %33 = dma.done [#allocation3], 2048
    $region25: #{linear_qnet_forward.1} parent=1 // pred_fallthru
      _
    %v35 = vld [vmem:[%s0] sm:$0xf]
    %v36 = vld [vmem:[%s0 + $0x4] sm:$0xf]
    %v37 = vld [vmem:[%s1] sm:$0xf]
    %v38 = vld [vmem:[%s1 + $0x4] sm:$0x3]
    %v39 = vld [vmem:[%s2] sm:$0x1]
    %v41 = vlaneseq
    %v42 = vshrl.u32 %v41, 7
    %v43 = vsub.s32 0, %v42
    %v44 = vrot.slane %v39, %v43
    %v48 = vunpack.c.l.b16 %v35
    %v49 = vunpack.c.l.b16 %v36
    %v50 = vpack.c.b16 %v49, %v48
    %v53 = vunpack.c.l.b16 %v37
    %v54 = vunpack.c.l.b16 %v38
    %v55 = vpack.c.b16 %v54, %v53
    %vm56 = vcmask 89088
    %v58 = vsel %vm56, %v50, 0
    %vm60 = vcmask 1044480
    %vm61 = vcmask 1045504
    %v62 = vsel %vm60, 4294967295, 65535
    %v63 = vsel %vm61, %v62, 0
    %v65 = vand.u32 %v55, %v63
    %67 = vmatprep.subr.bf16.mxu0 0
    %68 = vmatpush1.bf16.msra.mxu0 %v65
    %69 = vmatprep.subr.bf16.mxu0 0
    %70 = vmatpush1.bf16.msra.mxu0 0
    %71 = vmatprep.subr.bf16.mxu0 0
    %72 = vmatpush1.bf16.msra.mxu0 0
    %73 = vmatprep.subr.bf16.mxu0 0
    %74 = vmatpush1.bf16.msra.mxu0 0
    %75 = vmatprep.subr.bf16.mxu0 0
    %76 = vmatpush1.bf16.msra.mxu0 0
    %77 = vmatprep.subr.bf16.mxu0 0
    %78 = vmatpush1.bf16.msra.mxu0 0
    %79 = vmatprep.subr.bf16.mxu0 0
    %80 = vmatpush1.bf16.msra.mxu0 0
    %81 = vmatprep.subr.bf16.mxu0 0
    %82 = vmatpush1.bf16.msra.mxu0 0
    %83 = vmatprep.subr.bf16.mxu0 0
    %84 = vmatpush1.bf16.msra.mxu0 0
    %85 = vmatprep.subr.bf16.mxu0 0
    %86 = vmatpush1.bf16.msra.mxu0 0
    %87 = vmatprep.subr.bf16.mxu0 0
    %88 = vmatpush1.bf16.msra.mxu0 0
    %89 = vmatprep.subr.bf16.mxu0 0
    %90 = vmatpush1.bf16.msra.mxu0 0
    %91 = vmatprep.subr.bf16.mxu0 0
    %92 = vmatpush1.bf16.msra.mxu0 0
    %93 = vmatprep.subr.bf16.mxu0 0
    %94 = vmatpush1.bf16.msra.mxu0 0
    %95 = vmatprep.subr.bf16.mxu0 0
    %96 = vmatpush1.bf16.msra.mxu0 0
    %97 = vmatprep.subr.bf16.mxu0 0
    %98 = vmatpush1.bf16.msra.mxu0 0
    %99 = vmatprep.mubr.bf16.mxu0 0
    %100 = vmatmul.mubr.bf16.gmra.mrb[0].mxu0 %v58
    %v101 = vpop.f32.mrb[0].mxu0
    %v102 = vadd.f32 %v44, %v101
    %v103 = vpop.f32.mrb[0].mxu0
    %v104 = vpop.f32.mrb[0].mxu0
    %v105 = vadd.f32 %v44, %v104
    %v106 = vpop.f32.mrb[0].mxu0
    %107 = vdwg.mxu0
    %v108 = vmax.f32 %v102, 0.0
    %v109 = vmax.f32 %v105, 0.0
    %v110 = vld [vmem:[#allocation2] sm:$0xff]
    %v111 = vld [vmem:[#allocation2 + $0x8] sm:$0xff]
    %v112 = vld [vmem:[#allocation2 + $0x10] sm:$0xff]
    %v113 = vld [vmem:[#allocation2 + $0x18] sm:$0xff]
    %v114 = vld [vmem:[#allocation2 + $0x20] sm:$0xff]
    %v115 = vld [vmem:[#allocation2 + $0x28] sm:$0xff]
    %v116 = vld [vmem:[#allocation2 + $0x30] sm:$0xff]
    %v117 = vld [vmem:[#allocation2 + $0x38] sm:$0xff]
    %v118 = vld [vmem:[#allocation2 + $0x40] sm:$0xff]
    %v119 = vld [vmem:[#allocation2 + $0x48] sm:$0xff]
    %v120 = vld [vmem:[#allocation2 + $0x50] sm:$0xff]
    %v121 = vld [vmem:[#allocation2 + $0x58] sm:$0xff]
    %v122 = vld [vmem:[#allocation2 + $0x60] sm:$0xff]
    %v123 = vld [vmem:[#allocation2 + $0x68] sm:$0xff]
    %v124 = vld [vmem:[#allocation2 + $0x70] sm:$0xff]
    %v125 = vld [vmem:[#allocation2 + $0x78] sm:$0xff]
    %v126 = vld [vmem:[%s4] sm:$0x1]
    %v128 = vlaneseq
    %v129 = vshrl.u32 %v128, 7
    %v130 = vsub.s32 0, %v129
    %v131 = vrot.slane %v126, %v130
    %133 = vmatprep.subr.mxu0 0.0
    %134 = vmatpush1.msra.mxu0 %v110
    %135 = vmatprep.subr.mxu0 0.0
    %136 = vmatpush1.msra.mxu0 %v111
    %137 = vmatprep.subr.mxu0 0.0
    %138 = vmatpush1.msra.mxu0 %v112
    %139 = vmatprep.subr.mxu0 0.0
    %140 = vmatpush1.msra.mxu0 %v113
    %141 = vmatprep.subr.mxu0 0.0
    %142 = vmatpush1.msra.mxu0 %v114
    %143 = vmatprep.subr.mxu0 0.0
    %144 = vmatpush1.msra.mxu0 %v115
    %145 = vmatprep.subr.mxu0 0.0
    %146 = vmatpush1.msra.mxu0 %v116
    %147 = vmatprep.subr.mxu0 0.0
    %148 = vmatpush1.msra.mxu0 %v117
    %149 = vmatprep.subr.mxu0 0.0
    %150 = vmatpush1.msra.mxu0 %v118
    %151 = vmatprep.subr.mxu0 0.0
    %152 = vmatpush1.msra.mxu0 %v119
    %153 = vmatprep.subr.mxu0 0.0
    %154 = vmatpush1.msra.mxu0 %v120
    %155 = vmatprep.subr.mxu0 0.0
    %156 = vmatpush1.msra.mxu0 %v121
    %157 = vmatprep.subr.mxu0 0.0
    %158 = vmatpush1.msra.mxu0 %v122
    %159 = vmatprep.subr.mxu0 0.0
    %160 = vmatpush1.msra.mxu0 %v123
    %161 = vmatprep.subr.mxu0 0.0
    %162 = vmatpush1.msra.mxu0 %v124
    %163 = vmatprep.subr.mxu0 0.0
    %164 = vmatpush1.msra.mxu0 %v125
    %165 = vmatprep.subr.mxu0 0.0
    %166 = vmatpush1.msra.mxu0 0.0
    %167 = vmatprep.subr.mxu0 0.0
    %168 = vmatpush1.msra.mxu0 0.0
    %169 = vmatprep.subr.mxu0 0.0
    %170 = vmatpush1.msra.mxu0 0.0
    %171 = vmatprep.subr.mxu0 0.0
    %172 = vmatpush1.msra.mxu0 0.0
    %173 = vmatprep.subr.mxu0 0.0
    %174 = vmatpush1.msra.mxu0 0.0
    %175 = vmatprep.subr.mxu0 0.0
    %176 = vmatpush1.msra.mxu0 0.0
    %177 = vmatprep.subr.mxu0 0.0
    %178 = vmatpush1.msra.mxu0 0.0
    %179 = vmatprep.subr.mxu0 0.0
    %180 = vmatpush1.msra.mxu0 0.0
    %181 = vmatprep.subr.mxu0 0.0
    %182 = vmatpush1.msra.mxu0 0.0
    %183 = vmatprep.subr.mxu0 0.0
    %184 = vmatpush1.msra.mxu0 0.0
    %185 = vmatprep.subr.mxu0 0.0
    %186 = vmatpush1.msra.mxu0 0.0
    %187 = vmatprep.subr.mxu0 0.0
    %188 = vmatpush1.msra.mxu0 0.0
    %189 = vmatprep.subr.mxu0 0.0
    %190 = vmatpush1.msra.mxu0 0.0
    %191 = vmatprep.subr.mxu0 0.0
    %192 = vmatpush1.msra.mxu0 0.0
    %193 = vmatprep.subr.mxu0 0.0
    %194 = vmatpush1.msra.mxu0 0.0
    %195 = vmatprep.subr.mxu0 0.0
    %196 = vmatpush1.msra.mxu0 0.0
    %197 = vmatprep.mubr.f32.mxu0 0.0
    %198 = vmatmul.mubr.f32.gmra.mrb[0].mxu0 %v108
    %v199 = vpop.f32.mrb[0].mxu0
    %v200 = vadd.f32 %v131, %v199
    %v201 = vpop.f32.mrb[0].mxu0
    %202 = vmatprep.mubr.f32.mxu0 0.0
    %203 = vmatmul.mubr.f32.gmra.mrb[0].mxu0 %v109
    %v204 = vpop.f32.mrb[0].mxu0
    %v205 = vadd.f32 %v131, %v204
    %v206 = vpop.f32.mrb[0].mxu0
    %207 = vdwg.mxu0
    %v208 = vpack.c.bf16 %v205, %v200
    %v210 = vunpack.c.l.b16 %v208
    %v211 = vunpack.c.h.b16 %v208
    %v212 = vpack.c.b16 %v210, %v210
    %v213 = vpack.c.b16 %v211, %v211
    %216 = vst [vmem:[%s5] sm:$0xf] %v212
    %217 = vst [vmem:[%s5 + $0x4] sm:$0xf] %v213
    // Predicated region
    $region26: #{linear_qnet_forward.1} parent=1 // pred_check
      _
    $region27: #{linear_qnet_forward.1} parent=1 // pred_check_branch
      %219 = sbr.rel (0) target = $region29
    $region28: #{linear_qnet_forward.1} parent=1 // pred_region
      _
    $region29: #{linear_qnet_forward.1} parent=1 // pred_fallthru
      _
    // Predicated region
    $region30: #{linear_qnet_forward.1} parent=1 // pred_check
      _
    $region31: #{linear_qnet_forward.1} parent=1 // pred_check_branch
      %221 = sbr.rel (0) target = $region33
    $region32: #{linear_qnet_forward.1} parent=1 // pred_region
      _
    $region33: #{linear_qnet_forward.1} parent=1 // pred_fallthru
      _
    %222 = vsyncpa [#allocation3], 1

</llo_original>
